<compile_context>
chip_gen: v6e
topology: v6e:2x2x1
jax: 0.10.0
libtpu: 0.0.40
codegen_flags: <defaults>
</compile_context>

<pallas_src>
import functools

import jax
import jax.numpy as jnp
from jax.experimental import pallas as pl
from jax.experimental.pallas import tpu as pltpu

M_IN = 7      # input features  (m)
HID = 32      # hidden width
P_OUT = 4     # output features (p)

CHUNK = 512      # lanes per in-kernel sub-slab; (32, 512) f32 = 16 vregs
MAX_TB = 8192    # max lanes per grid tile (double-buffered x/out blocks ~0.7 MiB)
MIN_TILES = 4    # aim for >=4 grid steps: megacore split on v7x + pipelining


def _cdiv(a, b):
    return -(-a // b)


def _round_up(x, m):
    return _cdiv(x, m) * m


def _choose_tiling(batch):
    """Pick (tile_lanes, grid, padded_batch).  Padding waste <= grid * CHUNK lanes."""
    padded_b = _round_up(max(batch, 1), CHUNK)
    tb = min(MAX_TB, _round_up(_cdiv(padded_b, MIN_TILES), CHUNK))
    grid = _cdiv(padded_b, tb)
    # Re-tighten tb so the total padded extent hugs the real batch.
    tb = _round_up(_cdiv(padded_b, grid), CHUNK)
    return tb, grid, grid * tb


def _mlp_kernel(xt_ref, w1_ref, w2_ref, w3_ref, ot_ref, *, n_chunks, chunk):
    # xt: (7, TB)   w1: (32, 7)   w2: (32, 32)   w3: (4, 32)   ot: (4, TB)
    w1 = w1_ref[...]
    w2 = w2_ref[...]
    w3 = w3_ref[...]
    # Static chunk loop over 512-lane sub-slabs: both (32, chunk) intermediates
    # stay in vregs (no VMEM round-trip), offsets are compile-time lane-aligned.
    for c in range(n_chunks):
        sl = pl.ds(c * chunk, chunk)
        xc = xt_ref[:, sl]                                        # (7, chunk)
        h1 = jnp.tanh(jnp.dot(w1, xc, preferred_element_type=jnp.float32))
        h2 = jnp.tanh(jnp.dot(w2, h1, preferred_element_type=jnp.float32))
        ot_ref[:, sl] = jnp.dot(
            w3, h2, preferred_element_type=jnp.float32).astype(ot_ref.dtype)


@jax.jit
def deep_mlp_no_bias_t(xt, w1, w2, w3):
    """Fast, re-layout-free path.

    xt: (7, B) feature-major input; weights in PyTorch (out, in) layout.
    Returns (4, B) = W3 @ tanh(W2 @ tanh(W1 @ xt)).
    """
    _, batch = xt.shape
    tb, grid, full_b = _choose_tiling(batch)
    n_chunks = tb // CHUNK

    # Zero-pad batch lanes only up to the (tight) tiled extent; columns are
    # independent, so padding never contaminates real outputs.
    xt_p = xt if full_b == batch else jnp.pad(xt, ((0, 0), (0, full_b - batch)))

    flops = 2 * full_b * (M_IN * HID + HID * HID + HID * P_OUT)
    transcendentals = 2 * HID * full_b
    bytes_accessed = 4 * (full_b * (M_IN + P_OUT)
                          + M_IN * HID + HID * HID + HID * P_OUT)

    out_t = pl.pallas_call(
        functools.partial(_mlp_kernel, n_chunks=n_chunks, chunk=CHUNK),
        out_shape=jax.ShapeDtypeStruct((P_OUT, full_b), jnp.float32),
        grid=(grid,),
        in_specs=[
            pl.BlockSpec((M_IN, tb), lambda i: (0, i)),     # x^T tile (batch on lanes)
            pl.BlockSpec((HID, M_IN), lambda i: (0, 0)),    # W1, resident
            pl.BlockSpec((HID, HID), lambda i: (0, 0)),     # W2, resident
            pl.BlockSpec((P_OUT, HID), lambda i: (0, 0)),   # W3, resident
        ],
        out_specs=pl.BlockSpec((P_OUT, tb), lambda i: (0, i)),
        compiler_params=pltpu.CompilerParams(
            dimension_semantics=("parallel",),              # megacore shard on v7x
        ),
        cost_estimate=pl.CostEstimate(
            flops=flops,
            transcendentals=transcendentals,
            bytes_accessed=bytes_accessed,
        ),
    )(xt_p, w1, w2, w3)

    return out_t if full_b == batch else out_t[:, :batch]


@jax.jit
def deep_mlp_no_bias(x, w1, w2, w3):
    """PyTorch-layout convenience wrapper: x (B, 7) -> (B, 4).

    Prefer `deep_mlp_no_bias_t` if the caller can provide feature-major data;
    this wrapper pays for two materialized transposes outside the kernel.
    """
    return deep_mlp_no_bias_t(x.T, w1, w2, w3).T


def init_params(key):
    """PyTorch nn.Linear default init: U(-1/sqrt(fan_in), 1/sqrt(fan_in)),
    weights stored PyTorch-style as (out_features, in_features)."""
    k1, k2, k3 = jax.random.split(key, 3)
    b1 = 1.0 / jnp.sqrt(jnp.float32(M_IN))
    b2 = 1.0 / jnp.sqrt(jnp.float32(HID))
    b3 = 1.0 / jnp.sqrt(jnp.float32(HID))
    w1 = jax.random.uniform(k1, (HID, M_IN), jnp.float32, -b1, b1)
    w2 = jax.random.uniform(k2, (HID, HID), jnp.float32, -b2, b2)
    w3 = jax.random.uniform(k3, (P_OUT, HID), jnp.float32, -b3, b3)
    return w1, w2, w3


def reference(x, w1, w2, w3):
    h = jnp.tanh(x @ w1.T)
    h = jnp.tanh(h @ w2.T)
    return h @ w3.T


if __name__ == "__main__":
    key = jax.random.PRNGKey(0)
    kx, kp, kx2 = jax.random.split(key, 3)

    w1, w2, w3 = init_params(kp)

    # Small PyTorch-layout check (batch=8, features=7).
    batch = 8
    x = jax.random.normal(kx, (batch, M_IN), dtype=jnp.float32)
    out = jax.block_until_ready(deep_mlp_no_bias(x, w1, w2, w3))
    ref = reference(x, w1, w2, w3)
    assert out.shape == (batch, P_OUT), out.shape
    assert jnp.allclose(out, ref, atol=1e-5, rtol=1e-5), "mismatch vs reference (small)"

    # Multi-tile path (grid > 1, partial lane padding) via the feature-major entry.
    batch2 = 2304
    x2t = jax.random.normal(kx2, (M_IN, batch2), dtype=jnp.float32)
    out2t = jax.block_until_ready(deep_mlp_no_bias_t(x2t, w1, w2, w3))
    ref2t = reference(x2t.T, w1, w2, w3).T
    assert out2t.shape == (P_OUT, batch2), out2t.shape
    assert jnp.allclose(out2t, ref2t, atol=1e-5, rtol=1e-5), "mismatch vs reference (tiled)"

    print("KERNEL_OK")
</pallas_src>

<mosaic_0001>
module attributes {stable_mosaic.version = 11 : i64} {
  func.func @_mlp_kernel(%arg0: i32, %arg1: memref<7x512xf32, #tpu.memory_space<vmem>>, %arg2: memref<32x7xf32, #tpu.memory_space<vmem>>, %arg3: memref<32x32xf32, #tpu.memory_space<vmem>>, %arg4: memref<4x32xf32, #tpu.memory_space<vmem>>, %arg5: memref<4x512xf32, #tpu.memory_space<vmem>>) attributes {dimension_semantics = [#tpu.dimension_semantics<parallel>], iteration_bounds = array<i64: 1>, scalar_prefetch = 0 : i64, scratch_operands = 0 : i64, tpu.core_type = #tpu.core_type<tc>, window_params = [{transform_indices = @transform_0, window_bounds = array<i64: 7, 512>}, {pipeline_mode = #tpu.pipeline_mode<synchronous>, transform_indices = @transform_1, window_bounds = array<i64: 32, 7>}, {pipeline_mode = #tpu.pipeline_mode<synchronous>, transform_indices = @transform_2, window_bounds = array<i64: 32, 32>}, {pipeline_mode = #tpu.pipeline_mode<synchronous>, transform_indices = @transform_3, window_bounds = array<i64: 4, 32>}, {transform_indices = @transform_4, window_bounds = array<i64: 4, 512>}]} {
    %c0 = arith.constant 0 : index
    %c0_0 = arith.constant 0 : index
    %0 = vector.load %arg2[%c0, %c0_0] : memref<32x7xf32, #tpu.memory_space<vmem>>, vector<32x7xf32>
    %c0_1 = arith.constant 0 : index
    %c0_2 = arith.constant 0 : index
    %1 = vector.load %arg3[%c0_1, %c0_2] : memref<32x32xf32, #tpu.memory_space<vmem>>, vector<32x32xf32>
    %c0_3 = arith.constant 0 : index
    %c0_4 = arith.constant 0 : index
    %2 = vector.load %arg4[%c0_3, %c0_4] : memref<4x32xf32, #tpu.memory_space<vmem>>, vector<4x32xf32>
    %c0_5 = arith.constant 0 : index
    %c0_6 = arith.constant 0 : index
    %3 = vector.load %arg1[%c0_5, %c0_6] : memref<7x512xf32, #tpu.memory_space<vmem>>, vector<7x512xf32>
    %cst = arith.constant dense<0.000000e+00> : vector<32x512xf32>
    %4 = tpu.matmul %0, %3, %cst {dimension_numbers = #tpu.dot_dimension_numbers<[1], [0], [0], [1], [0, 0, 1, 1], [], []>} : vector<32x7xf32>, vector<7x512xf32>, vector<32x512xf32> -> vector<32x512xf32>
    %5 = math.tanh %4 : vector<32x512xf32>
    %cst_7 = arith.constant dense<0.000000e+00> : vector<32x512xf32>
    %6 = tpu.matmul %1, %5, %cst_7 {dimension_numbers = #tpu.dot_dimension_numbers<[1], [0], [0], [1], [0, 0, 1, 1], [], []>} : vector<32x32xf32>, vector<32x512xf32>, vector<32x512xf32> -> vector<32x512xf32>
    %7 = math.tanh %6 : vector<32x512xf32>
    %cst_8 = arith.constant dense<0.000000e+00> : vector<4x512xf32>
    %8 = tpu.matmul %2, %7, %cst_8 {dimension_numbers = #tpu.dot_dimension_numbers<[1], [0], [0], [1], [0, 0, 1, 1], [], []>} : vector<4x32xf32>, vector<32x512xf32>, vector<4x512xf32> -> vector<4x512xf32>
    %c0_9 = arith.constant 0 : index
    %c0_10 = arith.constant 0 : index
    %9 = vector.load %arg5[%c0_9, %c0_10] : memref<4x512xf32, #tpu.memory_space<vmem>>, vector<4x512xf32>
    tpu.vector_store %arg5[%c0_9, %c0_10], %8 {strides = array<i32>} : memref<4x512xf32, #tpu.memory_space<vmem>>, vector<4x512xf32>,
    return
  }
  func.func @transform_0(%arg0: i32) -> (i32, i32) {
    %c0_i32 = arith.constant 0 : i32
    %c0_i32_0 = arith.constant 0 : i32
    return %c0_i32, %arg0 : i32, i32
  }
  func.func @transform_1(%arg0: i32) -> (i32, i32) {
    %c0_i32 = arith.constant 0 : i32
    %c0_i32_0 = arith.constant 0 : i32
    %c0_i32_1 = arith.constant 0 : i32
    return %c0_i32, %c0_i32_0 : i32, i32
  }
  func.func @transform_2(%arg0: i32) -> (i32, i32) {
    %c0_i32 = arith.constant 0 : i32
    %c0_i32_0 = arith.constant 0 : i32
    %c0_i32_1 = arith.constant 0 : i32
    return %c0_i32, %c0_i32_0 : i32, i32
  }
  func.func @transform_3(%arg0: i32) -> (i32, i32) {
    %c0_i32 = arith.constant 0 : i32
    %c0_i32_0 = arith.constant 0 : i32
    %c0_i32_1 = arith.constant 0 : i32
    return %c0_i32, %c0_i32_0 : i32, i32
  }
  func.func @transform_4(%arg0: i32) -> (i32, i32) {
    %c0_i32 = arith.constant 0 : i32
    %c0_i32_0 = arith.constant 0 : i32
    return %c0_i32, %arg0 : i32, i32
  }
}

</mosaic_0001>

<llo_original>
// kernel: deep_mlp_no_bias_t.1
$region0: #{deep_mlp_no_bias_t.1}
  #allocation0 [shape = 'u32[]', space=smem, size = 0x4, offset = 0x4, fixed_abs, tag = 'smem constant byte address 0x4 - core index']
  #allocation1 [shape = 'u32[144,128]{1,0:T(1,128)}', space=vmem, size = 0x12000, scoped, tag = 'internal scratch']
  %s0 = inlined_call_operand.vmem [shape: f32[7,512], index: 0, kind: input, shape index: {}]
  %s1 = inlined_call_operand.vmem [shape: f32[32,7], index: 1, kind: input, shape index: {}]
  %s2 = inlined_call_operand.vmem [shape: f32[32,32], index: 2, kind: input, shape index: {}]
  %s3 = inlined_call_operand.vmem [shape: f32[4,32], index: 3, kind: input, shape index: {}]
  %s4 = inlined_call_operand.vmem [shape: f32[4,512], index: 4, kind: output, shape index: {}]
  %s5 = sld [smem:[#allocation0]]
  $region26: #{deep_mlp_no_bias_t.1} parent=0
    _
  %s7 = ssub.s32 1, %s5
  %s8 = scalar_select 0, %s7, %s5
  // Predicated region
  $region2: #{deep_mlp_no_bias_t.1} parent=0 // pred_check
    _
  $region3: #{deep_mlp_no_bias_t.1} parent=0 // pred_check_branch
    %10 = sbr.rel (0) target = $region5
  $region4: #{deep_mlp_no_bias_t.1} parent=0 // pred_region
    _
  $region5: #{deep_mlp_no_bias_t.1} parent=0 // pred_fallthru
    _
  // Predicated region
  $region6: #{deep_mlp_no_bias_t.1} parent=0 // pred_check
    _
  $region7: #{deep_mlp_no_bias_t.1} parent=0 // pred_check_branch
    %12 = sbr.rel (0) target = $region9
  $region8: #{deep_mlp_no_bias_t.1} parent=0 // pred_region
    _
  $region9: #{deep_mlp_no_bias_t.1} parent=0 // pred_fallthru
    _
  // Predicated region
  $region10: #{deep_mlp_no_bias_t.1} parent=0 // pred_check
    _
  $region11: #{deep_mlp_no_bias_t.1} parent=0 // pred_check_branch
    %14 = sbr.rel (0) target = $region13
  $region12: #{deep_mlp_no_bias_t.1} parent=0 // pred_region
    _
  $region13: #{deep_mlp_no_bias_t.1} parent=0 // pred_fallthru
    _
  // Predicated region
  $region14: #{deep_mlp_no_bias_t.1} parent=0 // pred_check
    _
  $region15: #{deep_mlp_no_bias_t.1} parent=0 // pred_check_branch
    %16 = sbr.rel (0) target = $region17
  $region16: #{deep_mlp_no_bias_t.1} parent=0 // pred_region
    _
  $region17: #{deep_mlp_no_bias_t.1} parent=0 // pred_fallthru
    _
  %v17 = vld [vmem:[%s1] sm:$0xff]
  %v18 = vld [vmem:[%s1 + $0x8] sm:$0xff]
  %v19 = vld [vmem:[%s1 + $0x10] sm:$0xff]
  %v20 = vld [vmem:[%s1 + $0x18] sm:$0xff]
  %v21 = vld [vmem:[%s2] sm:$0xff]
  %v22 = vld [vmem:[%s2 + $0x8] sm:$0xff]
  %v23 = vld [vmem:[%s2 + $0x10] sm:$0xff]
  %v24 = vld [vmem:[%s2 + $0x18] sm:$0xff]
  %v25 = vld [vmem:[%s3] sm:$0xf]
  %v26 = vld [vmem:[%s0] sm:$0x7f]
  %v27 = vld [vmem:[%s0 + $0x8] sm:$0x7f]
  %v28 = vld [vmem:[%s0 + $0x10] sm:$0x7f]
  %v29 = vld [vmem:[%s0 + $0x18] sm:$0x7f]
  %vm30 = vcmask 56320
  %v32 = vsel %vm30, %v17, 0
  %v35 = vsel %vm30, %v18, 0
  %v38 = vsel %vm30, %v19, 0
  %v41 = vsel %vm30, %v20, 0
  %vm43 = vcmask 1046528
  %v45 = vsel %vm43, %v26, 0
  %v48 = vsel %vm43, %v27, 0
  %v51 = vsel %vm43, %v28, 0
  %v54 = vsel %vm43, %v29, 0
  %56 = vmatprep.subr.mxu0 0.0
  %57 = vmatpush1.msra.mxu0 0.0
  %58 = vmatprep.subr.mxu0 0.0
  %59 = vmatpush1.msra.mxu0 0.0
  %60 = vmatprep.subr.mxu0 0.0
  %61 = vmatpush1.msra.mxu0 0.0
  %62 = vmatprep.subr.mxu0 0.0
  %63 = vmatpush1.msra.mxu0 0.0
  %64 = vmatprep.subr.mxu0 0.0
  %65 = vmatpush1.msra.mxu0 0.0
  %66 = vmatprep.subr.mxu0 0.0
  %67 = vmatpush1.msra.mxu0 0.0
  %68 = vmatprep.subr.mxu0 0.0
  %69 = vmatpush1.msra.mxu0 0.0
  %70 = vmatprep.subr.mxu0 0.0
  %71 = vmatpush1.msra.mxu0 0.0
  %72 = vmatprep.subr.mxu0 0.0
  %73 = vmatpush1.msra.mxu0 0.0
  %74 = vmatprep.subr.mxu0 0.0
  %75 = vmatpush1.msra.mxu0 0.0
  %76 = vmatprep.subr.mxu0 0.0
  %77 = vmatpush1.msra.mxu0 0.0
  %78 = vmatprep.subr.mxu0 0.0
  %79 = vmatpush1.msra.mxu0 0.0
  %80 = vmatprep.subr.mxu0 0.0
  %81 = vmatpush1.msra.mxu0 0.0
  %82 = vmatprep.subr.mxu0 0.0
  %83 = vmatpush1.msra.mxu0 0.0
  %84 = vmatprep.subr.mxu0 0.0
  %85 = vmatpush1.msra.mxu0 0.0
  %86 = vmatprep.subr.mxu0 %v48
  %87 = vmatpush1.msra.mxu0 %v45
  %88 = vmatprep.subr.mxu0 0.0
  %89 = vmatpush2.msra.mxu0 0.0
  %90 = vmatprep.subr.mxu0 0.0
  %91 = vmatpush2.msra.mxu0 0.0
  %92 = vmatprep.subr.mxu0 0.0
  %93 = vmatpush2.msra.mxu0 0.0
  %94 = vmatprep.subr.mxu0 0.0
  %95 = vmatpush2.msra.mxu0 0.0
  %96 = vmatprep.subr.mxu0 0.0
  %97 = vmatpush2.msra.mxu0 0.0
  %98 = vmatprep.subr.mxu0 0.0
  %99 = vmatpush2.msra.mxu0 0.0
  %100 = vmatprep.subr.mxu0 0.0
  %101 = vmatpush2.msra.mxu0 0.0
  %102 = vmatprep.subr.mxu0 0.0
  %103 = vmatpush2.msra.mxu0 0.0
  %104 = vmatprep.subr.mxu0 0.0
  %105 = vmatpush2.msra.mxu0 0.0
  %106 = vmatprep.subr.mxu0 0.0
  %107 = vmatpush2.msra.mxu0 0.0
  %108 = vmatprep.subr.mxu0 0.0
  %109 = vmatpush2.msra.mxu0 0.0
  %110 = vmatprep.subr.mxu0 0.0
  %111 = vmatpush2.msra.mxu0 0.0
  %112 = vmatprep.subr.mxu0 0.0
  %113 = vmatpush2.msra.mxu0 0.0
  %114 = vmatprep.subr.mxu0 0.0
  %115 = vmatpush2.msra.mxu0 0.0
  %116 = vmatprep.subr.mxu0 0.0
  %117 = vmatpush2.msra.mxu0 0.0
  %118 = vmatprep.subr.mxu0 0.0
  %119 = vmatpush2.msra.mxu0 0.0
  %120 = vmatprep.mubr.f32.mxu0 0.0
  %121 = vmatmul.mubr.f32.gmra.mxu0 %v32
  %v122 = vpop.f32.mrf.mxu0
  %v123 = vadd.f32 0.0, %v122
  %v124 = vpop.f32.mrf.mxu0
  %v125 = vadd.f32 0.0, %v124
  %126 = vmatprep.mubr.f32.mxu0 0.0
  %127 = vmatmul.mubr.f32.gmra.mxu0 %v35
  %v128 = vpop.f32.mrf.mxu0
  %v129 = vadd.f32 0.0, %v128
  %v130 = vpop.f32.mrf.mxu0
  %v131 = vadd.f32 0.0, %v130
  %132 = vmatprep.mubr.f32.mxu0 0.0
  %133 = vmatmul.mubr.f32.gmra.mxu0 %v38
  %v134 = vpop.f32.mrf.mxu0
  %v135 = vadd.f32 0.0, %v134
  %v136 = vpop.f32.mrf.mxu0
  %v137 = vadd.f32 0.0, %v136
  %138 = vmatprep.mubr.f32.mxu0 0.0
  %139 = vmatmul.mubr.f32.gmra.mxu0 %v41
  %v140 = vpop.f32.mrf.mxu0
  %v141 = vadd.f32 0.0, %v140
  %v142 = vpop.f32.mrf.mxu0
  %v143 = vadd.f32 0.0, %v142
  %144 = vdwg.mxu0
  %145 = vmatprep.subr.mxu0 0.0
  %146 = vmatpush1.msra.mxu0 0.0
  %147 = vmatprep.subr.mxu0 0.0
  %148 = vmatpush1.msra.mxu0 0.0
  %149 = vmatprep.subr.mxu0 0.0
  %150 = vmatpush1.msra.mxu0 0.0
  %151 = vmatprep.subr.mxu0 0.0
  %152 = vmatpush1.msra.mxu0 0.0
  %153 = vmatprep.subr.mxu0 0.0
  %154 = vmatpush1.msra.mxu0 0.0
  %155 = vmatprep.subr.mxu0 0.0
  %156 = vmatpush1.msra.mxu0 0.0
  %157 = vmatprep.subr.mxu0 0.0
  %158 = vmatpush1.msra.mxu0 0.0
  %159 = vmatprep.subr.mxu0 0.0
  %160 = vmatpush1.msra.mxu0 0.0
  %161 = vmatprep.subr.mxu0 0.0
  %162 = vmatpush1.msra.mxu0 0.0
  %163 = vmatprep.subr.mxu0 0.0
  %164 = vmatpush1.msra.mxu0 0.0
  %165 = vmatprep.subr.mxu0 0.0
  %166 = vmatpush1.msra.mxu0 0.0
  %167 = vmatprep.subr.mxu0 0.0
  %168 = vmatpush1.msra.mxu0 0.0
  %169 = vmatprep.subr.mxu0 0.0
  %170 = vmatpush1.msra.mxu0 0.0
  %171 = vmatprep.subr.mxu0 0.0
  %172 = vmatpush1.msra.mxu0 0.0
  %173 = vmatprep.subr.mxu0 0.0
  %174 = vmatpush1.msra.mxu0 0.0
  %175 = vmatprep.subr.mxu0 %v54
  %176 = vmatpush1.msra.mxu0 %v51
  %177 = vmatprep.subr.mxu0 0.0
  %178 = vmatpush2.msra.mxu0 0.0
  %179 = vmatprep.subr.mxu0 0.0
  %180 = vmatpush2.msra.mxu0 0.0
  %181 = vmatprep.subr.mxu0 0.0
  %182 = vmatpush2.msra.mxu0 0.0
  %183 = vmatprep.subr.mxu0 0.0
  %184 = vmatpush2.msra.mxu0 0.0
  %185 = vmatprep.subr.mxu0 0.0
  %186 = vmatpush2.msra.mxu0 0.0
  %187 = vmatprep.subr.mxu0 0.0
  %188 = vmatpush2.msra.mxu0 0.0
  %189 = vmatprep.subr.mxu0 0.0
  %190 = vmatpush2.msra.mxu0 0.0
  %191 = vmatprep.subr.mxu0 0.0
  %192 = vmatpush2.msra.mxu0 0.0
  %193 = vmatprep.subr.mxu0 0.0
  %194 = vmatpush2.msra.mxu0 0.0
  %195 = vmatprep.subr.mxu0 0.0
  %196 = vmatpush2.msra.mxu0 0.0
  %197 = vmatprep.subr.mxu0 0.0
  %198 = vmatpush2.msra.mxu0 0.0
  %199 = vmatprep.subr.mxu0 0.0
  %200 = vmatpush2.msra.mxu0 0.0
  %201 = vmatprep.subr.mxu0 0.0
  %202 = vmatpush2.msra.mxu0 0.0
  %203 = vmatprep.subr.mxu0 0.0
  %204 = vmatpush2.msra.mxu0 0.0
  %205 = vmatprep.subr.mxu0 0.0
  %206 = vmatpush2.msra.mxu0 0.0
  %207 = vmatprep.subr.mxu0 0.0
  %208 = vmatpush2.msra.mxu0 0.0
  %209 = vmatprep.mubr.f32.mxu0 0.0
  %210 = vmatmul.mubr.f32.gmra.mxu0 %v32
  %v211 = vpop.f32.mrf.mxu0
  %v212 = vadd.f32 0.0, %v211
  %v213 = vpop.f32.mrf.mxu0
  %v214 = vadd.f32 0.0, %v213
  %215 = vmatprep.mubr.f32.mxu0 0.0
  %216 = vmatmul.mubr.f32.gmra.mxu0 %v35
  %v217 = vpop.f32.mrf.mxu0
  %v218 = vadd.f32 0.0, %v217
  %v219 = vpop.f32.mrf.mxu0
  %v220 = vadd.f32 0.0, %v219
  %221 = vmatprep.mubr.f32.mxu0 0.0
  %222 = vmatmul.mubr.f32.gmra.mxu0 %v38
  %v223 = vpop.f32.mrf.mxu0
  %v224 = vadd.f32 0.0, %v223
  %v225 = vpop.f32.mrf.mxu0
  %v226 = vadd.f32 0.0, %v225
  %227 = vmatprep.mubr.f32.mxu0 0.0
  %228 = vmatmul.mubr.f32.gmra.mxu0 %v41
  %v229 = vpop.f32.mrf.mxu0
  %v230 = vadd.f32 0.0, %v229
  %v231 = vpop.f32.mrf.mxu0
  %v232 = vadd.f32 0.0, %v231
  %233 = vdwg.mxu0
  %v234 = vtanh.pop %v123
  %v235 = vtanh.pop %v125
  %v236 = vtanh.pop %v212
  %v237 = vtanh.pop %v214
  %v238 = vtanh.pop %v129
  %v239 = vtanh.pop %v131
  %v240 = vtanh.pop %v218
  %v241 = vtanh.pop %v220
  %v242 = vtanh.pop %v135
  %v243 = vtanh.pop %v137
  %v244 = vtanh.pop %v224
  %v245 = vtanh.pop %v226
  %v246 = vtanh.pop %v141
  %v247 = vtanh.pop %v143
  %v248 = vtanh.pop %v230
  %v249 = vtanh.pop %v232
  %vm250 = vcmask 261120
  %v252 = vsel %vm250, %v21, 0
  %v255 = vsel %vm250, %v22, 0
  %v258 = vsel %vm250, %v23, 0
  %v261 = vsel %vm250, %v24, 0
  %263 = vmatprep.subr.mxu0 0.0
  %264 = vmatpush1.msra.mxu0 0.0
  %265 = vmatprep.subr.mxu0 0.0
  %266 = vmatpush1.msra.mxu0 0.0
  %267 = vmatprep.subr.mxu0 0.0
  %268 = vmatpush1.msra.mxu0 0.0
  %269 = vmatprep.subr.mxu0 0.0
  %270 = vmatpush1.msra.mxu0 0.0
  %271 = vmatprep.subr.mxu0 0.0
  %272 = vmatpush1.msra.mxu0 0.0
  %273 = vmatprep.subr.mxu0 0.0
  %274 = vmatpush1.msra.mxu0 0.0
  %275 = vmatprep.subr.mxu0 0.0
  %276 = vmatpush1.msra.mxu0 0.0
  %277 = vmatprep.subr.mxu0 0.0
  %278 = vmatpush1.msra.mxu0 0.0
  %279 = vmatprep.subr.mxu0 0.0
  %280 = vmatpush1.msra.mxu0 0.0
  %281 = vmatprep.subr.mxu0 0.0
  %282 = vmatpush1.msra.mxu0 0.0
  %283 = vmatprep.subr.mxu0 0.0
  %284 = vmatpush1.msra.mxu0 0.0
  %285 = vmatprep.subr.mxu0 0.0
  %286 = vmatpush1.msra.mxu0 0.0
  %287 = vmatprep.subr.mxu0 %v247
  %288 = vmatpush1.msra.mxu0 %v246
  %289 = vmatprep.subr.mxu0 %v243
  %290 = vmatpush1.msra.mxu0 %v242
  %291 = vmatprep.subr.mxu0 %v239
  %292 = vmatpush1.msra.mxu0 %v238
  %293 = vmatprep.subr.mxu0 %v235
  %294 = vmatpush1.msra.mxu0 %v234
  %295 = vmatprep.subr.mxu0 0.0
  %296 = vmatpush2.msra.mxu0 0.0
  %297 = vmatprep.subr.mxu0 0.0
  %298 = vmatpush2.msra.mxu0 0.0
  %299 = vmatprep.subr.mxu0 0.0
  %300 = vmatpush2.msra.mxu0 0.0
  %301 = vmatprep.subr.mxu0 0.0
  %302 = vmatpush2.msra.mxu0 0.0
  %303 = vmatprep.subr.mxu0 0.0
  %304 = vmatpush2.msra.mxu0 0.0
  %305 = vmatprep.subr.mxu0 0.0
  %306 = vmatpush2.msra.mxu0 0.0
  %307 = vmatprep.subr.mxu0 0.0
  %308 = vmatpush2.msra.mxu0 0.0
  %309 = vmatprep.subr.mxu0 0.0
  %310 = vmatpush2.msra.mxu0 0.0
  %311 = vmatprep.subr.mxu0 0.0
  %312 = vmatpush2.msra.mxu0 0.0
  %313 = vmatprep.subr.mxu0 0.0
  %314 = vmatpush2.msra.mxu0 0.0
  %315 = vmatprep.subr.mxu0 0.0
  %316 = vmatpush2.msra.mxu0 0.0
  %317 = vmatprep.subr.mxu0 0.0
  %318 = vmatpush2.msra.mxu0 0.0
  %319 = vmatprep.subr.mxu0 0.0
  %320 = vmatpush2.msra.mxu0 0.0
  %321 = vmatprep.subr.mxu0 0.0
  %322 = vmatpush2.msra.mxu0 0.0
  %323 = vmatprep.subr.mxu0 0.0
  %324 = vmatpush2.msra.mxu0 0.0
  %325 = vmatprep.subr.mxu0 0.0
  %326 = vmatpush2.msra.mxu0 0.0
  %327 = vmatprep.mubr.f32.mxu0 0.0
  %328 = vmatmul.mubr.f32.gmra.mxu0 %v252
  %v329 = vpop.f32.mrf.mxu0
  %v330 = vadd.f32 0.0, %v329
  %v331 = vpop.f32.mrf.mxu0
  %v332 = vadd.f32 0.0, %v331
  %333 = vmatprep.mubr.f32.mxu0 0.0
  %334 = vmatmul.mubr.f32.gmra.mxu0 %v255
  %v335 = vpop.f32.mrf.mxu0
  %v336 = vadd.f32 0.0, %v335
  %v337 = vpop.f32.mrf.mxu0
  %v338 = vadd.f32 0.0, %v337
  %339 = vmatprep.mubr.f32.mxu0 0.0
  %340 = vmatmul.mubr.f32.gmra.mxu0 %v258
  %v341 = vpop.f32.mrf.mxu0
  %v342 = vadd.f32 0.0, %v341
  %v343 = vpop.f32.mrf.mxu0
  %v344 = vadd.f32 0.0, %v343
  %345 = vmatprep.mubr.f32.mxu0 0.0
  %346 = vmatmul.mubr.f32.gmra.mxu0 %v261
  %v347 = vpop.f32.mrf.mxu0
  %v348 = vadd.f32 0.0, %v347
  %v349 = vpop.f32.mrf.mxu0
  %v350 = vadd.f32 0.0, %v349
  %351 = vdwg.mxu0
  %352 = vmatprep.subr.mxu0 0.0
  %353 = vmatpush1.msra.mxu0 0.0
  %354 = vmatprep.subr.mxu0 0.0
  %355 = vmatpush1.msra.mxu0 0.0
  %356 = vmatprep.subr.mxu0 0.0
  %357 = vmatpush1.msra.mxu0 0.0
  %358 = vmatprep.subr.mxu0 0.0
  %359 = vmatpush1.msra.mxu0 0.0
  %360 = vmatprep.subr.mxu0 0.0
  %361 = vmatpush1.msra.mxu0 0.0
  %362 = vmatprep.subr.mxu0 0.0
  %363 = vmatpush1.msra.mxu0 0.0
  %364 = vmatprep.subr.mxu0 0.0
  %365 = vmatpush1.msra.mxu0 0.0
  %366 = vmatprep.subr.mxu0 0.0
  %367 = vmatpush1.msra.mxu0 0.0
  %368 = vmatprep.subr.mxu0 0.0
  %369 = vmatpush1.msra.mxu0 0.0
  %370 = vmatprep.subr.mxu0 0.0
  %371 = vmatpush1.msra.mxu0 0.0
  %372 = vmatprep.subr.mxu0 0.0
  %373 = vmatpush1.msra.mxu0 0.0
  %374 = vmatprep.subr.mxu0 0.0
  %375 = vmatpush1.msra.mxu0 0.0
  %376 = vmatprep.subr.mxu0 %v249
  %377 = vmatpush1.msra.mxu0 %v248
  %378 = vmatprep.subr.mxu0 %v245
  %379 = vmatpush1.msra.mxu0 %v244
  %380 = vmatprep.subr.mxu0 %v241
  %381 = vmatpush1.msra.mxu0 %v240
  %382 = vmatprep.subr.mxu0 %v237
  %383 = vmatpush1.msra.mxu0 %v236
  %384 = vmatprep.subr.mxu0 0.0
  %385 = vmatpush2.msra.mxu0 0.0
  %386 = vmatprep.subr.mxu0 0.0
  %387 = vmatpush2.msra.mxu0 0.0
  %388 = vmatprep.subr.mxu0 0.0
  %389 = vmatpush2.msra.mxu0 0.0
  %390 = vmatprep.subr.mxu0 0.0
  %391 = vmatpush2.msra.mxu0 0.0
  %392 = vmatprep.subr.mxu0 0.0
  %393 = vmatpush2.msra.mxu0 0.0
  %394 = vmatprep.subr.mxu0 0.0
  %395 = vmatpush2.msra.mxu0 0.0
  %396 = vmatprep.subr.mxu0 0.0
  %397 = vmatpush2.msra.mxu0 0.0
  %398 = vmatprep.subr.mxu0 0.0
  %399 = vmatpush2.msra.mxu0 0.0
  %400 = vmatprep.subr.mxu0 0.0
  %401 = vmatpush2.msra.mxu0 0.0
  %402 = vmatprep.subr.mxu0 0.0
  %403 = vmatpush2.msra.mxu0 0.0
  %404 = vmatprep.subr.mxu0 0.0
  %405 = vmatpush2.msra.mxu0 0.0
  %406 = vmatprep.subr.mxu0 0.0
  %407 = vmatpush2.msra.mxu0 0.0
  %408 = vmatprep.subr.mxu0 0.0
  %409 = vmatpush2.msra.mxu0 0.0
  %410 = vmatprep.subr.mxu0 0.0
  %411 = vmatpush2.msra.mxu0 0.0
  %412 = vmatprep.subr.mxu0 0.0
  %413 = vmatpush2.msra.mxu0 0.0
  %414 = vmatprep.subr.mxu0 0.0
  %415 = vmatpush2.msra.mxu0 0.0
  %416 = vmatprep.mubr.f32.mxu0 0.0
  %417 = vmatmul.mubr.f32.gmra.mxu0 %v252
  %v418 = vpop.f32.mrf.mxu0
  %v419 = vadd.f32 0.0, %v418
  %v420 = vpop.f32.mrf.mxu0
  %v421 = vadd.f32 0.0, %v420
  %422 = vmatprep.mubr.f32.mxu0 0.0
  %423 = vmatmul.mubr.f32.gmra.mxu0 %v255
  %v424 = vpop.f32.mrf.mxu0
  %v425 = vadd.f32 0.0, %v424
  %v426 = vpop.f32.mrf.mxu0
  %v427 = vadd.f32 0.0, %v426
  %428 = vmatprep.mubr.f32.mxu0 0.0
  %429 = vmatmul.mubr.f32.gmra.mxu0 %v258
  %v430 = vpop.f32.mrf.mxu0
  %v431 = vadd.f32 0.0, %v430
  %v432 = vpop.f32.mrf.mxu0
  %v433 = vadd.f32 0.0, %v432
  %434 = vmatprep.mubr.f32.mxu0 0.0
  %435 = vmatmul.mubr.f32.gmra.mxu0 %v261
  %v436 = vpop.f32.mrf.mxu0
  %v437 = vadd.f32 0.0, %v436
  %v438 = vpop.f32.mrf.mxu0
  %v439 = vadd.f32 0.0, %v438
  %440 = vdwg.mxu0
  %v441 = vtanh.pop %v330
  %v442 = vtanh.pop %v332
  %v443 = vtanh.pop %v419
  %v444 = vtanh.pop %v421
  %v445 = vtanh.pop %v336
  %v446 = vtanh.pop %v338
  %v447 = vtanh.pop %v425
  %v448 = vtanh.pop %v427
  %v449 = vtanh.pop %v342
  %v450 = vtanh.pop %v344
  %v451 = vtanh.pop %v431
  %v452 = vtanh.pop %v433
  %v453 = vtanh.pop %v348
  %v454 = vtanh.pop %v350
  %v455 = vtanh.pop %v437
  %v456 = vtanh.pop %v439
  %v458 = vsel %vm250, %v25, 0
  %460 = vmatprep.subr.mxu0 0.0
  %461 = vmatpush1.msra.mxu0 0.0
  %462 = vmatprep.subr.mxu0 0.0
  %463 = vmatpush1.msra.mxu0 0.0
  %464 = vmatprep.subr.mxu0 0.0
  %465 = vmatpush1.msra.mxu0 0.0
  %466 = vmatprep.subr.mxu0 0.0
  %467 = vmatpush1.msra.mxu0 0.0
  %468 = vmatprep.subr.mxu0 0.0
  %469 = vmatpush1.msra.mxu0 0.0
  %470 = vmatprep.subr.mxu0 0.0
  %471 = vmatpush1.msra.mxu0 0.0
  %472 = vmatprep.subr.mxu0 0.0
  %473 = vmatpush1.msra.mxu0 0.0
  %474 = vmatprep.subr.mxu0 0.0
  %475 = vmatpush1.msra.mxu0 0.0
  %476 = vmatprep.subr.mxu0 0.0
  %477 = vmatpush1.msra.mxu0 0.0
  %478 = vmatprep.subr.mxu0 0.0
  %479 = vmatpush1.msra.mxu0 0.0
  %480 = vmatprep.subr.mxu0 0.0
  %481 = vmatpush1.msra.mxu0 0.0
  %482 = vmatprep.subr.mxu0 0.0
  %483 = vmatpush1.msra.mxu0 0.0
  %484 = vmatprep.subr.mxu0 %v454
  %485 = vmatpush1.msra.mxu0 %v453
  %486 = vmatprep.subr.mxu0 %v450
  %487 = vmatpush1.msra.mxu0 %v449
  %488 = vmatprep.subr.mxu0 %v446
  %489 = vmatpush1.msra.mxu0 %v445
  %490 = vmatprep.subr.mxu0 %v442
  %491 = vmatpush1.msra.mxu0 %v441
  %492 = vmatprep.subr.mxu0 0.0
  %493 = vmatpush2.msra.mxu0 0.0
  %494 = vmatprep.subr.mxu0 0.0
  %495 = vmatpush2.msra.mxu0 0.0
  %496 = vmatprep.subr.mxu0 0.0
  %497 = vmatpush2.msra.mxu0 0.0
  %498 = vmatprep.subr.mxu0 0.0
  %499 = vmatpush2.msra.mxu0 0.0
  %500 = vmatprep.subr.mxu0 0.0
  %501 = vmatpush2.msra.mxu0 0.0
  %502 = vmatprep.subr.mxu0 0.0
  %503 = vmatpush2.msra.mxu0 0.0
  %504 = vmatprep.subr.mxu0 0.0
  %505 = vmatpush2.msra.mxu0 0.0
  %506 = vmatprep.subr.mxu0 0.0
  %507 = vmatpush2.msra.mxu0 0.0
  %508 = vmatprep.subr.mxu0 0.0
  %509 = vmatpush2.msra.mxu0 0.0
  %510 = vmatprep.subr.mxu0 0.0
  %511 = vmatpush2.msra.mxu0 0.0
  %512 = vmatprep.subr.mxu0 0.0
  %513 = vmatpush2.msra.mxu0 0.0
  %514 = vmatprep.subr.mxu0 0.0
  %515 = vmatpush2.msra.mxu0 0.0
  %516 = vmatprep.subr.mxu0 0.0
  %517 = vmatpush2.msra.mxu0 0.0
  %518 = vmatprep.subr.mxu0 0.0
  %519 = vmatpush2.msra.mxu0 0.0
  %520 = vmatprep.subr.mxu0 0.0
  %521 = vmatpush2.msra.mxu0 0.0
  %522 = vmatprep.subr.mxu0 0.0
  %523 = vmatpush2.msra.mxu0 0.0
  %524 = vmatprep.mubr.f32.mxu0 0.0
  %525 = vmatmul.mubr.f32.gmra.mxu0 %v458
  %v526 = vpop.f32.mrf.mxu0
  %v527 = vadd.f32 0.0, %v526
  %v528 = vpop.f32.mrf.mxu0
  %v529 = vadd.f32 0.0, %v528
  %530 = vdwg.mxu0
  %531 = vmatprep.subr.mxu0 0.0
  %532 = vmatpush1.msra.mxu0 0.0
  %533 = vmatprep.subr.mxu0 0.0
  %534 = vmatpush1.msra.mxu0 0.0
  %535 = vmatprep.subr.mxu0 0.0
  %536 = vmatpush1.msra.mxu0 0.0
  %537 = vmatprep.subr.mxu0 0.0
  %538 = vmatpush1.msra.mxu0 0.0
  %539 = vmatprep.subr.mxu0 0.0
  %540 = vmatpush1.msra.mxu0 0.0
  %541 = vmatprep.subr.mxu0 0.0
  %542 = vmatpush1.msra.mxu0 0.0
  %543 = vmatprep.subr.mxu0 0.0
  %544 = vmatpush1.msra.mxu0 0.0
  %545 = vmatprep.subr.mxu0 0.0
  %546 = vmatpush1.msra.mxu0 0.0
  %547 = vmatprep.subr.mxu0 0.0
  %548 = vmatpush1.msra.mxu0 0.0
  %549 = vmatprep.subr.mxu0 0.0
  %550 = vmatpush1.msra.mxu0 0.0
  %551 = vmatprep.subr.mxu0 0.0
  %552 = vmatpush1.msra.mxu0 0.0
  %553 = vmatprep.subr.mxu0 0.0
  %554 = vmatpush1.msra.mxu0 0.0
  %555 = vmatprep.subr.mxu0 %v456
  %556 = vmatpush1.msra.mxu0 %v455
  %557 = vmatprep.subr.mxu0 %v452
  %558 = vmatpush1.msra.mxu0 %v451
  %559 = vmatprep.subr.mxu0 %v448
  %560 = vmatpush1.msra.mxu0 %v447
  %561 = vmatprep.subr.mxu0 %v444
  %562 = vmatpush1.msra.mxu0 %v443
  %563 = vmatprep.subr.mxu0 0.0
  %564 = vmatpush2.msra.mxu0 0.0
  %565 = vmatprep.subr.mxu0 0.0
  %566 = vmatpush2.msra.mxu0 0.0
  %567 = vmatprep.subr.mxu0 0.0
  %568 = vmatpush2.msra.mxu0 0.0
  %569 = vmatprep.subr.mxu0 0.0
  %570 = vmatpush2.msra.mxu0 0.0
  %571 = vmatprep.subr.mxu0 0.0
  %572 = vmatpush2.msra.mxu0 0.0
  %573 = vmatprep.subr.mxu0 0.0
  %574 = vmatpush2.msra.mxu0 0.0
  %575 = vmatprep.subr.mxu0 0.0
  %576 = vmatpush2.msra.mxu0 0.0
  %577 = vmatprep.subr.mxu0 0.0
  %578 = vmatpush2.msra.mxu0 0.0
  %579 = vmatprep.subr.mxu0 0.0
  %580 = vmatpush2.msra.mxu0 0.0
  %581 = vmatprep.subr.mxu0 0.0
  %582 = vmatpush2.msra.mxu0 0.0
  %583 = vmatprep.subr.mxu0 0.0
  %584 = vmatpush2.msra.mxu0 0.0
  %585 = vmatprep.subr.mxu0 0.0
  %586 = vmatpush2.msra.mxu0 0.0
  %587 = vmatprep.subr.mxu0 0.0
  %588 = vmatpush2.msra.mxu0 0.0
  %589 = vmatprep.subr.mxu0 0.0
  %590 = vmatpush2.msra.mxu0 0.0
  %591 = vmatprep.subr.mxu0 0.0
  %592 = vmatpush2.msra.mxu0 0.0
  %593 = vmatprep.subr.mxu0 0.0
  %594 = vmatpush2.msra.mxu0 0.0
  %595 = vmatprep.mubr.f32.mxu0 0.0
  %596 = vmatmul.mubr.f32.gmra.mxu0 %v458
  %v597 = vpop.f32.mrf.mxu0
  %v598 = vadd.f32 0.0, %v597
  %v599 = vpop.f32.mrf.mxu0
  %v600 = vadd.f32 0.0, %v599
  %601 = vdwg.mxu0
  %v606 = vcombine.low %v527, %v529
  %v607 = vcombine.low %v598, %v600
  %610 = vst [vmem:[%s4] sm:$0xff] %v606
  %611 = vst [vmem:[%s4 + $0x8] sm:$0xff] %v607
  // Predicated region
  $region18: #{deep_mlp_no_bias_t.1} parent=0 // pred_check
    _
  $region19: #{deep_mlp_no_bias_t.1} parent=0 // pred_check_branch
    %613 = sbr.rel (0) target = $region21
  $region20: #{deep_mlp_no_bias_t.1} parent=0 // pred_region
    _
  $region21: #{deep_mlp_no_bias_t.1} parent=0 // pred_fallthru
    _
  // Predicated region
  $region22: #{deep_mlp_no_bias_t.1} parent=0 // pred_check
    _
  $region23: #{deep_mlp_no_bias_t.1} parent=0 // pred_check_branch
    %615 = sbr.rel (0) target = $region25
  $region24: #{deep_mlp_no_bias_t.1} parent=0 // pred_region
    _
  $region25: #{deep_mlp_no_bias_t.1} parent=0 // pred_fallthru
    _

</llo_original>
